<compile_context>
chip_gen: v6e
topology: v6e:2x2x1
jax: 0.10.0
libtpu: 0.0.40
codegen_flags: <defaults>
</compile_context>

<pallas_src>
import jax
import jax.numpy as jnp
from jax.experimental import pallas as pl
from jax.experimental.pallas import tpu as pltpu

LANE = 128     # f32 lane width
SUBLANE = 8    # f32 sublane width


def _round_up(x, m):
    return (x + m - 1) // m * m


def _sigmoid(x):
    # tanh-based sigmoid: one EUP op per element, no exp + divide.
    return 0.5 * (jnp.tanh(0.5 * x) + 1.0)


def lstm_cell_kernel(xh_ref, c_ref, w_ref, b_ref, h_out_ref, c_out_ref):
    """One LSTMCell step for one (batch tile, hidden block) grid cell."""
    th = c_ref.shape[-1]

    # Single fused matmul: [x | h] @ [W_xh ; W_hh] + (b_xh + b_hh).
    # bf16 MXU inputs, f32 accumulation.
    xh = xh_ref[...].astype(jnp.bfloat16)
    gates = jnp.dot(xh, w_ref[...], preferred_element_type=jnp.float32)
    gates = gates + b_ref[...]

    inputgate = _sigmoid(gates[:, 0 * th:1 * th])
    forgetgate = _sigmoid(gates[:, 1 * th:2 * th])
    cellgate = jnp.tanh(gates[:, 2 * th:3 * th])
    outputgate = _sigmoid(gates[:, 3 * th:4 * th])

    c_new = forgetgate * c_ref[...] + inputgate * cellgate
    h_new = outputgate * jnp.tanh(c_new)

    h_out_ref[...] = h_new.astype(h_out_ref.dtype)
    c_out_ref[...] = c_new.astype(c_out_ref.dtype)


def prepare_lstm_params(w_xh, b_xh, w_hh, b_hh, hidden_size):
    """Repack PyTorch-layout LSTMCell params for the kernel (done once).

    w_xh: (4H, I), w_hh: (4H, H), b_*: (4H,) -- gate order [i, f, g, o].

    Returns (W, b, meta):
      W: (Kp, n_h*4*TH) bf16  stacked [W_xh ; W_hh]; hidden units grouped into
                              n_h blocks of TH lanes, gates [i|f|g|o]
                              contiguous (lane-dense) inside each block.
      b: (1,  n_h*4*TH) f32   pre-fused b_xh + b_hh, same layout.
      meta: static layout info.
    Kp = round_up(I + H, 8): the contraction dim only needs sublane (8)
    alignment, not 128.
    """
    H = hidden_size
    I = w_xh.shape[1]
    assert w_xh.shape == (4 * H, I) and w_hh.shape == (4 * H, H)

    TH = min(_round_up(H, LANE), 2 * LANE)   # 128 or 256 lanes per hidden block
    Hpt = _round_up(H, TH)
    n_h = Hpt // TH
    K = I + H
    Kp = _round_up(K, SUBLANE)

    # (K, 4, H): row k, gate g, hidden unit h.
    w = jnp.concatenate([w_xh.T, w_hh.T], axis=0).reshape(K, 4, H)
    w = jnp.pad(w, ((0, Kp - K), (0, 0), (0, Hpt - H)))
    w = w.reshape(Kp, 4, n_h, TH).transpose(0, 2, 1, 3).reshape(Kp, n_h * 4 * TH)
    w = w.astype(jnp.bfloat16)

    b = (b_xh + b_hh).reshape(4, H)
    b = jnp.pad(b, ((0, 0), (0, Hpt - H)))
    b = b.reshape(4, n_h, TH).transpose(1, 0, 2).reshape(1, n_h * 4 * TH)
    b = b.astype(jnp.float32)

    meta = dict(I=I, H=H, K=K, Kp=Kp, TH=TH, Hpt=Hpt, n_h=n_h)
    return w, b, meta


def _vmem_limit_bytes(tb, kp, th):
    """Explicit scoped-VMEM request with headroom (per-grid-step footprint)."""
    f32, bf16 = 4, 2
    per_step = (
        2 * tb * kp * f32          # [x|h] tile, double-buffered
        + 2 * kp * 4 * th * bf16   # weight slab, double-buffered
        + 2 * 4 * th * f32         # bias slab
        + 2 * tb * th * f32        # c tile
        + 4 * tb * th * f32        # h_out / c_out tiles
        + 8 * tb * 4 * th * f32    # gates + activation temporaries
    )
    return int(min(max(2 * per_step, 32 * 1024 * 1024), 64 * 1024 * 1024))


def lstm_cell(x, h, c, w_p, b_p, meta):
    """x: (B, I), h/c: (B, H); packed params from prepare_lstm_params.

    Returns (h_new, c_new), both (B, H).
    """
    # TODO(synk): when driving a sequence, keep h/c in padded (Bp, Hpt) layout
    # across steps (pad/slice only at the boundaries) and fuse the time loop
    # into the kernel (time as an "arbitrary" grid axis, weights resident, h/c
    # carried in VMEM scratch) so weights are read from HBM once, not per step.
    B, I = x.shape
    H = h.shape[-1]
    assert I == meta["I"] and H == meta["H"]
    K, Kp = meta["K"], meta["Kp"]
    TH, Hpt, n_h = meta["TH"], meta["Hpt"], meta["n_h"]

    Bp = _round_up(B, SUBLANE)
    TB = min(Bp, 256)             # up to 256 rows: fills the 256-deep MXU (v6e/v7x)
    n_b = (Bp + TB - 1) // TB
    Bp = n_b * TB

    # Fused [x | h] operand; padded once per call.
    xh = jnp.pad(jnp.concatenate([x, h], axis=1), ((0, Bp - B), (0, Kp - K)))
    cp = jnp.pad(c, ((0, Bp - B), (0, Hpt - H)))

    bh_spec = pl.BlockSpec((TB, TH), lambda i, j: (i, j))

    h_out, c_out = pl.pallas_call(
        lstm_cell_kernel,
        out_shape=(
            jax.ShapeDtypeStruct((Bp, Hpt), x.dtype),
            jax.ShapeDtypeStruct((Bp, Hpt), x.dtype),
        ),
        grid=(n_b, n_h),
        in_specs=[
            pl.BlockSpec((TB, Kp), lambda i, j: (i, 0)),       # [x|h] tile
            bh_spec,                                           # c tile
            pl.BlockSpec((Kp, 4 * TH), lambda i, j: (0, j)),   # weight slab
            pl.BlockSpec((1, 4 * TH), lambda i, j: (0, j)),    # fused bias slab
        ],
        out_specs=(bh_spec, bh_spec),
        # Cell state updates in place (h cannot be aliased: fused into xh).
        input_output_aliases={1: 1},
        compiler_params=pltpu.CompilerParams(
            dimension_semantics=("parallel", "parallel"),
            vmem_limit_bytes=_vmem_limit_bytes(TB, Kp, TH)),
    )(xh, cp, w_p, b_p)

    return h_out[:B, :H], c_out[:B, :H]


def reference_lstm_cell(x, h, c, w_xh, b_xh, w_hh, b_hh):
    """Pure-JAX mirror of the PyTorch LSTMCell.forward (PyTorch weight layout)."""
    gate_x = x @ w_xh.T + b_xh
    gate_h = h @ w_hh.T + b_hh
    x_i, x_f, x_c, x_o = jnp.split(gate_x, 4, axis=1)
    h_i, h_f, h_c, h_o = jnp.split(gate_h, 4, axis=1)
    i = jax.nn.sigmoid(x_i + h_i)
    f = jax.nn.sigmoid(x_f + h_f)
    g = jnp.tanh(x_c + h_c)
    o = jax.nn.sigmoid(x_o + h_o)
    c_new = f * c + i * g
    h_new = o * jnp.tanh(c_new)
    return h_new, c_new


if __name__ == "__main__":
    key = jax.random.PRNGKey(0)
    B, I, H = 4, 16, 32          # batch, input_size, hidden_size
    num_chunks = 4
    std = 1.0 / (H ** 0.5)

    keys = jax.random.split(key, 7)
    x = jax.random.normal(keys[0], (B, I), jnp.float32)
    h0 = jax.random.normal(keys[1], (B, H), jnp.float32)
    c0 = jax.random.normal(keys[2], (B, H), jnp.float32)

    # PyTorch Linear layout: weight (out, in), bias (out,).
    w_xh = jax.random.uniform(keys[3], (num_chunks * H, I), jnp.float32, -std, std)
    w_hh = jax.random.uniform(keys[4], (num_chunks * H, H), jnp.float32, -std, std)
    b_xh = jax.random.uniform(keys[5], (num_chunks * H,), jnp.float32, -std, std)
    b_hh = jax.random.uniform(keys[6], (num_chunks * H,), jnp.float32, -std, std)

    # LSTMCell.reset_parameters: forget-gate bias chunk [H:2H] = 1/H.
    incr_bias = 1.0 / H
    b_xh = b_xh.at[H:2 * H].set(incr_bias)
    b_hh = b_hh.at[H:2 * H].set(incr_bias)

    # One-time parameter repack (fused [Wxh;Whh], lane-dense gate blocks,
    # bf16 weights, pre-summed bias).
    w_p, b_p, meta = prepare_lstm_params(w_xh, b_xh, w_hh, b_hh, H)

    h1, c1 = lstm_cell(x, h0, c0, w_p, b_p, meta)
    h1, c1 = jax.block_until_ready((h1, c1))

    h_ref, c_ref = reference_lstm_cell(x, h0, c0, w_xh, b_xh, w_hh, b_hh)

    assert h1.shape == (B, H) and c1.shape == (B, H)
    # bf16 matmul inputs with f32 accumulation -> relaxed tolerance vs f32 ref.
    assert jnp.allclose(h1, h_ref, atol=2e-2, rtol=2e-2), \
        float(jnp.max(jnp.abs(h1 - h_ref)))
    assert jnp.allclose(c1, c_ref, atol=2e-2, rtol=2e-2), \
        float(jnp.max(jnp.abs(c1 - c_ref)))

    # TODO(synk): PySyft's init_hidden MPC/PointerTensor/FixedPrecision branches
    # have no Pallas equivalent; zero-init hidden state is covered by passing zeros.
    print("KERNEL_OK")
</pallas_src>

<mosaic_0001>
module attributes {stable_mosaic.version = 11 : i64} {
  func.func @lstm_cell_kernel(%arg0: i32, %arg1: i32, %arg2: memref<8x48xf32, #tpu.memory_space<vmem>>, %arg3: memref<8x128xf32, #tpu.memory_space<vmem>>, %arg4: memref<48x512xbf16, #tpu.memory_space<vmem>>, %arg5: memref<1x512xf32, #tpu.memory_space<vmem>>, %arg6: memref<8x128xf32, #tpu.memory_space<vmem>>, %arg7: memref<8x128xf32, #tpu.memory_space<vmem>>) attributes {dimension_semantics = [#tpu.dimension_semantics<parallel>, #tpu.dimension_semantics<parallel>], iteration_bounds = array<i64: 1, 1>, scalar_prefetch = 0 : i64, scratch_operands = 0 : i64, tpu.core_type = #tpu.core_type<tc>, window_params = [{transform_indices = @transform_0, window_bounds = array<i64: 8, 48>}, {transform_indices = @transform_1, window_bounds = array<i64: 8, 128>}, {transform_indices = @transform_2, window_bounds = array<i64: 48, 512>}, {transform_indices = @transform_3, window_bounds = array<i64: 1, 512>}, {transform_indices = @transform_4, window_bounds = array<i64: 8, 128>}, {transform_indices = @transform_5, window_bounds = array<i64: 8, 128>}]} {
    %c0 = arith.constant 0 : index
    %c0_0 = arith.constant 0 : index
    %0 = vector.load %arg2[%c0, %c0_0] : memref<8x48xf32, #tpu.memory_space<vmem>>, vector<8x48xf32>
    %1 = arith.truncf %0 : vector<8x48xf32> to vector<8x48xbf16>
    %c0_1 = arith.constant 0 : index
    %c0_2 = arith.constant 0 : index
    %2 = vector.load %arg4[%c0_1, %c0_2] : memref<48x512xbf16, #tpu.memory_space<vmem>>, vector<48x512xbf16>
    %cst = arith.constant dense<0.000000e+00> : vector<8x512xf32>
    %3 = tpu.matmul %1, %2, %cst {dimension_numbers = #tpu.dot_dimension_numbers<[1], [0], [0], [1], [0, 0, 1, 1], [], []>} : vector<8x48xbf16>, vector<48x512xbf16>, vector<8x512xf32> -> vector<8x512xf32>
    %c0_3 = arith.constant 0 : index
    %c0_4 = arith.constant 0 : index
    %4 = vector.load %arg5[%c0_3, %c0_4] : memref<1x512xf32, #tpu.memory_space<vmem>>, vector<1x512xf32>
    %5 = vector.broadcast %4 : vector<1x512xf32> to vector<8x512xf32>
    %6 = arith.addf %3, %5 : vector<8x512xf32>
    %7 = vector.extract_strided_slice %6 {offsets = [0, 0], sizes = [8, 128], strides = [1, 1]} : vector<8x512xf32> to vector<8x128xf32>
    %cst_5 = arith.constant 5.000000e-01 : f32
    %8 = vector.broadcast %cst_5 : f32 to vector<8x128xf32>
    %9 = arith.mulf %8, %7 : vector<8x128xf32>
    %10 = math.tanh %9 : vector<8x128xf32>
    %cst_6 = arith.constant 1.000000e+00 : f32
    %11 = vector.broadcast %cst_6 : f32 to vector<8x128xf32>
    %12 = arith.addf %10, %11 : vector<8x128xf32>
    %cst_7 = arith.constant 5.000000e-01 : f32
    %13 = vector.broadcast %cst_7 : f32 to vector<8x128xf32>
    %14 = arith.mulf %13, %12 : vector<8x128xf32>
    %15 = vector.extract_strided_slice %6 {offsets = [0, 128], sizes = [8, 128], strides = [1, 1]} : vector<8x512xf32> to vector<8x128xf32>
    %cst_8 = arith.constant 5.000000e-01 : f32
    %16 = vector.broadcast %cst_8 : f32 to vector<8x128xf32>
    %17 = arith.mulf %16, %15 : vector<8x128xf32>
    %18 = math.tanh %17 : vector<8x128xf32>
    %cst_9 = arith.constant 1.000000e+00 : f32
    %19 = vector.broadcast %cst_9 : f32 to vector<8x128xf32>
    %20 = arith.addf %18, %19 : vector<8x128xf32>
    %cst_10 = arith.constant 5.000000e-01 : f32
    %21 = vector.broadcast %cst_10 : f32 to vector<8x128xf32>
    %22 = arith.mulf %21, %20 : vector<8x128xf32>
    %23 = vector.extract_strided_slice %6 {offsets = [0, 256], sizes = [8, 128], strides = [1, 1]} : vector<8x512xf32> to vector<8x128xf32>
    %24 = math.tanh %23 : vector<8x128xf32>
    %25 = vector.extract_strided_slice %6 {offsets = [0, 384], sizes = [8, 128], strides = [1, 1]} : vector<8x512xf32> to vector<8x128xf32>
    %cst_11 = arith.constant 5.000000e-01 : f32
    %26 = vector.broadcast %cst_11 : f32 to vector<8x128xf32>
    %27 = arith.mulf %26, %25 : vector<8x128xf32>
    %28 = math.tanh %27 : vector<8x128xf32>
    %cst_12 = arith.constant 1.000000e+00 : f32
    %29 = vector.broadcast %cst_12 : f32 to vector<8x128xf32>
    %30 = arith.addf %28, %29 : vector<8x128xf32>
    %cst_13 = arith.constant 5.000000e-01 : f32
    %31 = vector.broadcast %cst_13 : f32 to vector<8x128xf32>
    %32 = arith.mulf %31, %30 : vector<8x128xf32>
    %c0_14 = arith.constant 0 : index
    %c0_15 = arith.constant 0 : index
    %33 = vector.load %arg3[%c0_14, %c0_15] : memref<8x128xf32, #tpu.memory_space<vmem>>, vector<8x128xf32>
    %34 = arith.mulf %22, %33 : vector<8x128xf32>
    %35 = arith.mulf %14, %24 : vector<8x128xf32>
    %36 = arith.addf %34, %35 : vector<8x128xf32>
    %37 = math.tanh %36 : vector<8x128xf32>
    %38 = arith.mulf %32, %37 : vector<8x128xf32>
    %c0_16 = arith.constant 0 : index
    %c0_17 = arith.constant 0 : index
    %39 = vector.load %arg6[%c0_16, %c0_17] : memref<8x128xf32, #tpu.memory_space<vmem>>, vector<8x128xf32>
    tpu.vector_store %arg6[%c0_16, %c0_17], %38 {strides = array<i32>} : memref<8x128xf32, #tpu.memory_space<vmem>>, vector<8x128xf32>,
    %c0_18 = arith.constant 0 : index
    %c0_19 = arith.constant 0 : index
    %40 = vector.load %arg7[%c0_18, %c0_19] : memref<8x128xf32, #tpu.memory_space<vmem>>, vector<8x128xf32>
    tpu.vector_store %arg7[%c0_18, %c0_19], %36 {strides = array<i32>} : memref<8x128xf32, #tpu.memory_space<vmem>>, vector<8x128xf32>,
    return
  }
  func.func @transform_0(%arg0: i32, %arg1: i32) -> (i32, i32) {
    %c0_i32 = arith.constant 0 : i32
    %c0_i32_0 = arith.constant 0 : i32
    return %arg0, %c0_i32 : i32, i32
  }
  func.func @transform_1(%arg0: i32, %arg1: i32) -> (i32, i32) {
    %c0_i32 = arith.constant 0 : i32
    return %arg0, %arg1 : i32, i32
  }
  func.func @transform_2(%arg0: i32, %arg1: i32) -> (i32, i32) {
    %c0_i32 = arith.constant 0 : i32
    %c0_i32_0 = arith.constant 0 : i32
    return %c0_i32, %arg1 : i32, i32
  }
  func.func @transform_3(%arg0: i32, %arg1: i32) -> (i32, i32) {
    %c0_i32 = arith.constant 0 : i32
    %c0_i32_0 = arith.constant 0 : i32
    return %c0_i32, %arg1 : i32, i32
  }
  func.func @transform_4(%arg0: i32, %arg1: i32) -> (i32, i32) {
    %c0_i32 = arith.constant 0 : i32
    return %arg0, %arg1 : i32, i32
  }
  func.func @transform_5(%arg0: i32, %arg1: i32) -> (i32, i32) {
    %c0_i32 = arith.constant 0 : i32
    return %arg0, %arg1 : i32, i32
  }
}

</mosaic_0001>

<llo_original>
// kernel: tpu_custom_call.1
$region0: #{tpu_custom_call.1}
  #allocation0 [shape = 'u32[]', space=smem, size = 0x4, offset = 0x4, fixed_abs, tag = 'smem constant byte address 0x4 - core index']
  #allocation1 [shape = 'u32[144,128]{1,0:T(1,128)}', space=vmem, size = 0x12000, scoped, tag = 'internal scratch']
  %s0 = inlined_call_operand.vmem [shape: f32[8,48], index: 0, kind: input, shape index: {}]
  %s1 = inlined_call_operand.hbm [shape: f32[8,128], index: 1, kind: input, shape index: {}, may-alias: {1,5}]
  %s2 = inlined_call_operand.hbm [shape: bf16[48,512], index: 2, kind: input, shape index: {}]
  %s3 = inlined_call_operand.vmem [shape: f32[1,512], index: 3, kind: input, shape index: {}]
  %s4 = inlined_call_operand.hbm [shape: f32[8,128], index: 4, kind: output, shape index: {0}]
  %s5 = inlined_call_operand.hbm [shape: f32[8,128], index: 5, kind: output, shape index: {1}, may-alias: {1,5}]
  %6 = xla_tuple %s4, %s5
  %s7 = sld [smem:[#allocation0]]
  $region42: #{tpu_custom_call.1} parent=0
    _
  %s9 = ssub.s32 1, %s7
  %s10 = scalar_select 0, %s9, %s7
  $region1: #{tpu_custom_call.1} parent=0
    #allocation2 [shape = 'u8[4096]{0}', space=vmem, size = 0x1000, scoped, tag = 'input window, operand 1, single buffered']
    #allocation3 [shape = 's32[1]{0}', space=sflag, size = 0x4, scoped, tag = 'scoped memory for tpu_custom_call.1']
    #allocation4 [shape = 's32[1]{0}', space=sflag, size = 0x4, scoped, tag = 'scoped memory for tpu_custom_call.1']
    #allocation5 [shape = 'u8[49152]{0}', space=vmem, size = 0xc000, scoped, tag = 'input window, operand 2, single buffered']
    #allocation6 [shape = 's32[1]{0}', space=sflag, size = 0x4, scoped, tag = 'scoped memory for tpu_custom_call.1']
    #allocation7 [shape = 'u8[4096]{0}', space=vmem, size = 0x1000, scoped, tag = 'output window, operand 0, single buffered']
    #allocation8 [shape = 'u8[4096]{0}', space=vmem, size = 0x1000, scoped, tag = 'output window, operand 1, single buffered']
    #allocation9 [shape = 's32[1]{0}', space=sflag, size = 0x4, scoped, tag = 'scoped memory for tpu_custom_call.1']
    %11 = vsyncpa [#allocation3], 0
    %12 = vsyncpa [#allocation6], 0
    %13 = vsyncpa [#allocation4], 0
    %14 = vsyncpa [#allocation9], 0
    // Predicated region
    $region2: #{tpu_custom_call.1} parent=1 // pred_check
      _
    $region3: #{tpu_custom_call.1} parent=1 // pred_check_branch
      %16 = sbr.rel (0) target = $region5
    $region4: #{tpu_custom_call.1} parent=1 // pred_region
      _
    $region5: #{tpu_custom_call.1} parent=1 // pred_fallthru
      _
    // Predicated region
    $region6: #{tpu_custom_call.1} parent=1 // pred_check
      _
    $region7: #{tpu_custom_call.1} parent=1 // pred_check_branch
      %18 = sbr.rel (0) target = $region9
    $region8: #{tpu_custom_call.1} parent=1 // pred_region
      %s20 = ssub.s32 128, 128
      %21 = vsyncadd [#allocation3], %s20
      %s23 = sshll.u32 [#allocation2], 4
      %s24 = int_to_ptr.vmem [resolvable:$true] %s23
      %26 = dma.hbm_to_vmem [thread:$0]  %s1, 128, %s24, [#allocation3]
    $region9: #{tpu_custom_call.1} parent=1 // pred_fallthru
      _
    // Predicated region
    $region10: #{tpu_custom_call.1} parent=1 // pred_check
      _
    $region11: #{tpu_custom_call.1} parent=1 // pred_check_branch
      %28 = sbr.rel (0) target = $region13
    $region12: #{tpu_custom_call.1} parent=1 // pred_region
      %s30 = ssub.s32 1536, 1536
      %31 = vsyncadd [#allocation6], %s30
      %s32 = sshll.u32 [#allocation5], 4
      %s33 = int_to_ptr.vmem [resolvable:$true] %s32
      %38 = dma.hbm_to_vmem [thread:$0]  %s2, 1536, %s33, [#allocation6], 256, 256, 16
    $region13: #{tpu_custom_call.1} parent=1 // pred_fallthru
      _
    // Predicated region
    $region14: #{tpu_custom_call.1} parent=1 // pred_check
      _
    $region15: #{tpu_custom_call.1} parent=1 // pred_check_branch
      %40 = sbr.rel (0) target = $region17
    $region16: #{tpu_custom_call.1} parent=1 // pred_region
      _
    $region17: #{tpu_custom_call.1} parent=1 // pred_fallthru
      _
    // Predicated region
    $region18: #{tpu_custom_call.1} parent=1 // pred_check
      _
    $region19: #{tpu_custom_call.1} parent=1 // pred_check_branch
      %42 = sbr.rel (0) target = $region21
    $region20: #{tpu_custom_call.1} parent=1 // pred_region
      %43 = dma.done [#allocation3], 128
    $region21: #{tpu_custom_call.1} parent=1 // pred_fallthru
      _
    // Predicated region
    $region22: #{tpu_custom_call.1} parent=1 // pred_check
      _
    $region23: #{tpu_custom_call.1} parent=1 // pred_check_branch
      %45 = sbr.rel (0) target = $region25
    $region24: #{tpu_custom_call.1} parent=1 // pred_region
      %46 = dma.done [#allocation6], 1536
    $region25: #{tpu_custom_call.1} parent=1 // pred_fallthru
      _
    %v48 = vld [vmem:[%s0] sm:$0xff]
    %v49 = vpack.c.bf16 %v48, %v48
    %v50 = vld [vmem:[#allocation5] sm:$0xff]
    %v51 = vld [vmem:[#allocation5 + $0x8] sm:$0xff]
    %v52 = vld [vmem:[#allocation5 + $0x10] sm:$0xff]
    %v53 = vld [vmem:[#allocation5 + $0x18] sm:$0xff]
    %v54 = vld [vmem:[#allocation5 + $0x20] sm:$0xff]
    %v55 = vld [vmem:[#allocation5 + $0x28] sm:$0xff]
    %v56 = vld [vmem:[#allocation5 + $0x30] sm:$0xff]
    %v57 = vld [vmem:[#allocation5 + $0x38] sm:$0xff]
    %v58 = vld [vmem:[#allocation5 + $0x40] sm:$0xff]
    %v59 = vld [vmem:[#allocation5 + $0x48] sm:$0xff]
    %v60 = vld [vmem:[#allocation5 + $0x50] sm:$0xff]
    %v61 = vld [vmem:[#allocation5 + $0x58] sm:$0xff]
    %v62 = vld [vmem:[%s3] sm:$0xf]
    %v64 = vlaneseq
    %v65 = vshrl.u32 %v64, 7
    %v66 = vsub.s32 0, %v65
    %v67 = vrot.slane %v62, %v66
    %v68 = vlaneseq
    %v69 = vshrl.u32 %v68, 7
    %v70 = vsub.s32 1, %v69
    %v71 = vrot.slane %v62, %v70
    %v72 = vlaneseq
    %v73 = vshrl.u32 %v72, 7
    %v74 = vsub.s32 2, %v73
    %v75 = vrot.slane %v62, %v74
    %v76 = vlaneseq
    %v77 = vshrl.u32 %v76, 7
    %v78 = vsub.s32 3, %v77
    %v79 = vrot.slane %v62, %v78
    %v96 = vunpack.c.l.b16 %v50
    %v97 = vunpack.c.h.b16 %v50
    %v98 = vunpack.c.l.b16 %v51
    %v99 = vunpack.c.h.b16 %v51
    %v100 = vunpack.c.l.b16 %v52
    %v101 = vunpack.c.h.b16 %v52
    %v102 = vunpack.c.l.b16 %v53
    %v103 = vunpack.c.h.b16 %v53
    %v104 = vunpack.c.l.b16 %v54
    %v105 = vunpack.c.h.b16 %v54
    %v106 = vunpack.c.l.b16 %v55
    %v107 = vunpack.c.h.b16 %v55
    %v108 = vunpack.c.l.b16 %v56
    %v109 = vunpack.c.h.b16 %v56
    %v110 = vunpack.c.l.b16 %v57
    %v111 = vunpack.c.h.b16 %v57
    %v112 = vunpack.c.l.b16 %v58
    %v113 = vunpack.c.h.b16 %v58
    %v114 = vunpack.c.l.b16 %v59
    %v115 = vunpack.c.h.b16 %v59
    %v116 = vunpack.c.l.b16 %v60
    %v117 = vunpack.c.h.b16 %v60
    %v118 = vunpack.c.l.b16 %v61
    %v119 = vunpack.c.h.b16 %v61
    %v120 = vpack.c.b16 %v100, %v96
    %v121 = vpack.c.b16 %v101, %v97
    %v122 = vpack.c.b16 %v102, %v98
    %v123 = vpack.c.b16 %v103, %v99
    %v124 = vpack.c.b16 %v108, %v104
    %v125 = vpack.c.b16 %v109, %v105
    %v126 = vpack.c.b16 %v110, %v106
    %v127 = vpack.c.b16 %v111, %v107
    %v128 = vpack.c.b16 %v116, %v112
    %v129 = vpack.c.b16 %v117, %v113
    %v130 = vpack.c.b16 %v118, %v114
    %v131 = vpack.c.b16 %v119, %v115
    %vm144 = vcmask 392192
    %v146 = vsel %vm144, %v49, 0
    %148 = vmatprep.subr.bf16.mxu0 0
    %149 = vmatpush1.bf16.msra.mxu0 0
    %150 = vmatprep.subr.bf16.mxu0 0
    %151 = vmatpush1.bf16.msra.mxu0 0
    %152 = vmatprep.subr.bf16.mxu0 0
    %153 = vmatpush1.bf16.msra.mxu0 0
    %154 = vmatprep.subr.bf16.mxu0 0
    %155 = vmatpush1.bf16.msra.mxu0 0
    %156 = vmatprep.subr.bf16.mxu0 0
    %157 = vmatpush1.bf16.msra.mxu0 0
    %158 = vmatprep.subr.bf16.mxu0 %v129
    %159 = vmatpush1.bf16.msra.mxu0 %v128
    %160 = vmatprep.subr.bf16.mxu0 %v125
    %161 = vmatpush1.bf16.msra.mxu0 %v124
    %162 = vmatprep.subr.bf16.mxu0 %v121
    %163 = vmatpush1.bf16.msra.mxu0 %v120
    %164 = vmatprep.subr.bf16.mxu0 0
    %165 = vmatpush2.bf16.msra.mxu0 0
    %166 = vmatprep.subr.bf16.mxu0 0
    %167 = vmatpush2.bf16.msra.mxu0 0
    %168 = vmatprep.subr.bf16.mxu0 0
    %169 = vmatpush2.bf16.msra.mxu0 0
    %170 = vmatprep.subr.bf16.mxu0 0
    %171 = vmatpush2.bf16.msra.mxu0 0
    %172 = vmatprep.subr.bf16.mxu0 0
    %173 = vmatpush2.bf16.msra.mxu0 0
    %174 = vmatprep.subr.bf16.mxu0 0
    %175 = vmatpush2.bf16.msra.mxu0 0
    %176 = vmatprep.subr.bf16.mxu0 0
    %177 = vmatpush2.bf16.msra.mxu0 0
    %178 = vmatprep.subr.bf16.mxu0 0
    %179 = vmatpush2.bf16.msra.mxu0 0
    %180 = vmatprep.mubr.bf16.mxu0 0
    %181 = vmatmul.mubr.bf16.gmra.mxu0 %v146
    %v182 = vpop.f32.mrf.mxu0
    %v183 = vadd.f32 %v67, %v182
    %v184 = vpop.f32.mrf.mxu0
    %v185 = vadd.f32 %v71, %v184
    %v186 = vpop.f32.mrf.mxu0
    %v187 = vpop.f32.mrf.mxu0
    %188 = vdwg.mxu0
    %189 = vmatprep.subr.bf16.mxu0 0
    %190 = vmatpush1.bf16.msra.mxu0 0
    %191 = vmatprep.subr.bf16.mxu0 0
    %192 = vmatpush1.bf16.msra.mxu0 0
    %193 = vmatprep.subr.bf16.mxu0 0
    %194 = vmatpush1.bf16.msra.mxu0 0
    %195 = vmatprep.subr.bf16.mxu0 0
    %196 = vmatpush1.bf16.msra.mxu0 0
    %197 = vmatprep.subr.bf16.mxu0 0
    %198 = vmatpush1.bf16.msra.mxu0 0
    %199 = vmatprep.subr.bf16.mxu0 %v131
    %200 = vmatpush1.bf16.msra.mxu0 %v130
    %201 = vmatprep.subr.bf16.mxu0 %v127
    %202 = vmatpush1.bf16.msra.mxu0 %v126
    %203 = vmatprep.subr.bf16.mxu0 %v123
    %204 = vmatpush1.bf16.msra.mxu0 %v122
    %205 = vmatprep.subr.bf16.mxu0 0
    %206 = vmatpush2.bf16.msra.mxu0 0
    %207 = vmatprep.subr.bf16.mxu0 0
    %208 = vmatpush2.bf16.msra.mxu0 0
    %209 = vmatprep.subr.bf16.mxu0 0
    %210 = vmatpush2.bf16.msra.mxu0 0
    %211 = vmatprep.subr.bf16.mxu0 0
    %212 = vmatpush2.bf16.msra.mxu0 0
    %213 = vmatprep.subr.bf16.mxu0 0
    %214 = vmatpush2.bf16.msra.mxu0 0
    %215 = vmatprep.subr.bf16.mxu0 0
    %216 = vmatpush2.bf16.msra.mxu0 0
    %217 = vmatprep.subr.bf16.mxu0 0
    %218 = vmatpush2.bf16.msra.mxu0 0
    %219 = vmatprep.subr.bf16.mxu0 0
    %220 = vmatpush2.bf16.msra.mxu0 0
    %221 = vmatprep.mubr.bf16.mxu0 0
    %222 = vmatmul.mubr.bf16.gmra.mxu0 %v146
    %v223 = vpop.f32.mrf.mxu0
    %v224 = vadd.f32 %v75, %v223
    %v225 = vpop.f32.mrf.mxu0
    %v226 = vadd.f32 %v79, %v225
    %v227 = vpop.f32.mrf.mxu0
    %v228 = vpop.f32.mrf.mxu0
    %229 = vdwg.mxu0
    %v230 = vmul.f32 %v183, 0.5
    %v231 = vtanh.pop %v230
    %v232 = vadd.f32 %v231, 1.0
    %v233 = vmul.f32 %v232, 0.5
    %v234 = vmul.f32 %v185, 0.5
    %v235 = vtanh.pop %v234
    %v236 = vadd.f32 %v235, 1.0
    %v237 = vmul.f32 %v236, 0.5
    %v238 = vtanh.pop %v224
    %v239 = vmul.f32 %v226, 0.5
    %v240 = vtanh.pop %v239
    %v241 = vadd.f32 %v240, 1.0
    %v242 = vmul.f32 %v241, 0.5
    %v243 = vld [vmem:[#allocation2] sm:$0xff]
    %v244 = vmul.f32 %v237, %v243
    %v245 = vmul.f32 %v233, %v238
    %v246 = vadd.f32 %v244, %v245
    %v247 = vtanh.pop %v246
    %v248 = vmul.f32 %v242, %v247
    %249 = vst [vmem:[#allocation7] sm:$0xff] %v248
    %250 = vst [vmem:[#allocation8] sm:$0xff] %v246
    // Predicated region
    $region26: #{tpu_custom_call.1} parent=1 // pred_check
      _
    $region27: #{tpu_custom_call.1} parent=1 // pred_check_branch
      %252 = sbr.rel (0) target = $region29
    $region28: #{tpu_custom_call.1} parent=1 // pred_region
      %s254 = ssub.s32 128, 128
      %255 = vsyncadd [#allocation4], %s254
      %s257 = sshll.u32 [#allocation7], 4
      %s258 = int_to_ptr.vmem [resolvable:$true] %s257
      %260 = dma.vmem_to_hbm [thread:$0]  %s258, 128, %s4, [#allocation4]
    $region29: #{tpu_custom_call.1} parent=1 // pred_fallthru
      _
    // Predicated region
    $region30: #{tpu_custom_call.1} parent=1 // pred_check
      _
    $region31: #{tpu_custom_call.1} parent=1 // pred_check_branch
      %262 = sbr.rel (0) target = $region33
    $region32: #{tpu_custom_call.1} parent=1 // pred_region
      %s264 = ssub.s32 128, 128
      %265 = vsyncadd [#allocation9], %s264
      %s267 = sshll.u32 [#allocation8], 4
      %s268 = int_to_ptr.vmem [resolvable:$true] %s267
      %270 = dma.vmem_to_hbm [thread:$0]  %s268, 128, %s5, [#allocation9]
    $region33: #{tpu_custom_call.1} parent=1 // pred_fallthru
      _
    // Predicated region
    $region34: #{tpu_custom_call.1} parent=1 // pred_check
      _
    $region35: #{tpu_custom_call.1} parent=1 // pred_check_branch
      %272 = sbr.rel (0) target = $region37
    $region36: #{tpu_custom_call.1} parent=1 // pred_region
      %273 = dma.done [#allocation4], 128
    $region37: #{tpu_custom_call.1} parent=1 // pred_fallthru
      _
    // Predicated region
    $region38: #{tpu_custom_call.1} parent=1 // pred_check
      _
    $region39: #{tpu_custom_call.1} parent=1 // pred_check_branch
      %275 = sbr.rel (0) target = $region41
    $region40: #{tpu_custom_call.1} parent=1 // pred_region
      %276 = dma.done [#allocation9], 128
    $region41: #{tpu_custom_call.1} parent=1 // pred_fallthru
      _
    %277 = vsyncpa [#allocation3], 1
    %278 = vsyncpa [#allocation6], 1
    %279 = vsyncpa [#allocation4], 1
    %280 = vsyncpa [#allocation9], 1

</llo_original>
